<compile_context>
chip_gen: v5e
topology: v5e:2x2
jax: 0.10.0
libtpu: 0.0.40
codegen_flags: <defaults>
</compile_context>

<pallas_src>
import jax
import jax.numpy as jnp
from jax.experimental import pallas as pl
from jax.experimental.pallas import tpu as pltpu


def intln_kernel(inv_s_ref, x_ref, params_ref, o_ref):
    """One (tm, H) tile of rows.

    inv_s_ref : (1, 1) SMEM   reciprocal of the activation scaling factor
    x_ref     : (tm, H) VMEM  input rows (normalized dim H on lanes)
    params_ref: (2, H) VMEM   row 0 = floor((bias/weight)/sf_out), row 1 = sf_out*weight
    o_ref     : (tm, H) VMEM  output rows
    """
    inv_s = inv_s_ref[0, 0]
    # Reciprocal-multiply instead of a full-tile f32 divide (biggest VALU/EUP
    # consumer previously); differs from torch's x/scaling_factor by <= 1 ulp.
    x_int = x_ref[...].astype(jnp.float32) * inv_s

    # mean_int = round(mean(x_int)); round-half-to-even matches torch.round.
    mean_int = jnp.round(jnp.mean(x_int, axis=-1, keepdims=True))
    y_int = x_int - mean_int
    var_int = jnp.sum(y_int * y_int, axis=-1, keepdims=True)

    # 10-step integer Newton sqrt starting at 2^16 (*0.5 == /2, exact).
    # TODO(synk): per perf feedback this per-row loop runs on a (tm, 1)
    # lane-sparse column; a lane-dense relayout to (tm//128, 128) would shrink
    # its VALU/EUP footprint ~100x, but needs a Mosaic reshape across the
    # lane/sublane tiling — left out to keep lowering robust.
    k = jnp.full_like(var_int, 2.0 ** 16)
    for _ in range(10):                      # static, unrolled (trip count 10)
        k = jnp.floor((k + jnp.floor(var_int / k)) * 0.5)
    std_int = k

    # Fold the /2 into the per-row factor (exact power-of-two scale) so the
    # hot (tm, H) elementwise path does a single multiply.
    factor_half = jnp.floor((2.0 ** 31 - 1.0) / std_int) * 0.5
    y_int = jnp.floor(y_int * factor_half)

    y_int = y_int + params_ref[0:1, :]                    # quantized bias
    o_ref[...] = (y_int * params_ref[1:2, :]).astype(o_ref.dtype)


def _pick_tm(n_rows, H, in_itemsize, out_itemsize, tm_max=1024,
             tile_budget_bytes=32 * 1024 * 1024):
    """Largest row tile whose double-buffered in+out tiles fit the VMEM budget.

    Budget is sized for v7x (64 MiB physical VMEM per TensorCore, 32 MiB scoped
    default) and is comfortable on v5e/v6e (128 MiB physical).
    """
    bytes_per_row = 2 * H * in_itemsize + 2 * H * out_itemsize  # x2 = double buffer
    tm = tile_budget_bytes // max(1, bytes_per_row)
    tm = int(max(8, min(tm_max, tm)))
    tm -= tm % 8                                   # keep sublane (8) alignment
    if n_rows > tm:
        return tm
    # Whole problem fits in one tile: still split in two when possible so a
    # v7x chip (2 TensorCores sharing the "parallel" grid axis) keeps both busy.
    half = (n_rows // 2) - ((n_rows // 2) % 8)
    return half if half >= 8 else n_rows


def int_layer_norm(x, weight, bias, s_pre, *, tm=None, out_dtype=jnp.float32):
    """IntLayerNorm.int_forward in Pallas.  Returns (x_out, scaling_factor).

    x: (B, S, H) activations, weight/bias: (H,), s_pre: scalar scaling factor.
    For production shapes keep H a multiple of 128 so stores are lane-dense
    unmasked vst (the toy H=32 test below is masked, which is fine for a demo).
    """
    B, S, H = x.shape
    R = B * S

    # --- plain-JAX parameter glue (tiny, matches the PyTorch module) ---
    dim_sqrt = jnp.sqrt(jnp.float32(H))                 # sqrt(n), n = x.shape[2]
    sf_scalar = dim_sqrt / (2.0 ** 30)                  # scalar output scaling factor
    w = weight.astype(jnp.float32)
    b = bias.astype(jnp.float32)
    bias_int = jnp.floor((b / w) / sf_scalar)           # (H,)
    sf_out = sf_scalar * w                              # (H,) per-channel output scale
    params = jnp.stack([bias_int, sf_out], axis=0)      # (2, H) packed operand

    x2 = x.reshape(R, H)                                # H -> lane dim
    inv_s = jnp.reshape(1.0 / jnp.asarray(s_pre, dtype=jnp.float32), (1, 1))

    out_dtype = jnp.dtype(out_dtype)
    if tm is None:
        tm = _pick_tm(R, H, x2.dtype.itemsize, out_dtype.itemsize)
    grid = (pl.cdiv(R, tm),)       # partial tail block handled by Pallas masking

    cost = pl.CostEstimate(
        flops=15 * R * H,
        transcendentals=0,
        bytes_accessed=R * H * (x2.dtype.itemsize + out_dtype.itemsize) + 2 * H * 4 + 4,
    )

    out = pl.pallas_call(
        intln_kernel,
        out_shape=jax.ShapeDtypeStruct((R, H), out_dtype),
        grid=grid,
        in_specs=[
            pl.BlockSpec(memory_space=pltpu.SMEM),        # 1/s_pre scalar
            pl.BlockSpec((tm, H), lambda i: (i, 0)),      # x rows
            pl.BlockSpec((2, H), lambda i: (0, 0)),       # packed (bias_int, sf_out)
        ],
        out_specs=pl.BlockSpec((tm, H), lambda i: (i, 0)),
        compiler_params=pltpu.CompilerParams(
            dimension_semantics=("parallel",),
            vmem_limit_bytes=48 * 1024 * 1024),
        cost_estimate=cost,
    )(inv_s, x2, params)

    return out.reshape(B, S, H), sf_out


def _reference(x, weight, bias, s_pre):
    """Pure-JAX reproduction of IntLayerNorm.int_forward for sanity checking.

    Mirrors the kernel's reciprocal-multiply for x/scaling_factor (<= 1 ulp
    from torch's divide, before any floor/round quantization)."""
    H = x.shape[2]
    dim_sqrt = jnp.sqrt(jnp.float32(H))
    inv_s = 1.0 / s_pre
    x_int = x * inv_s
    mean_int = jnp.round(jnp.mean(x_int, axis=2, keepdims=True))
    y_int = x_int - mean_int
    var_int = jnp.sum(y_int ** 2, axis=2, keepdims=True)
    k = jnp.full_like(var_int, 2.0 ** 16)
    for _ in range(10):
        k = jnp.floor((k + jnp.floor(var_int / k)) / 2.0)
    factor = jnp.floor((2.0 ** 31 - 1.0) / k)
    y_int = jnp.floor(y_int * factor / 2.0)
    sf = dim_sqrt / 2.0 ** 30
    bias_int = jnp.floor((bias / weight) / sf)
    y_int = y_int + bias_int
    sf = sf * weight
    return y_int * sf, sf


if __name__ == "__main__":
    key = jax.random.PRNGKey(0)
    k1, k2, k3 = jax.random.split(key, 3)

    # --- small smoke test (matches the module's (B, S, H) layout) ---
    B, S, H = 2, 8, 32
    x = jax.random.normal(k1, (B, S, H), dtype=jnp.float32)
    weight = 0.5 + jax.random.uniform(k2, (H,), dtype=jnp.float32)   # away from 0
    bias = 0.1 * jax.random.normal(k3, (H,), dtype=jnp.float32)
    s_pre = jnp.float32(0.02)

    out, sf_out = int_layer_norm(x, weight, bias, s_pre)
    out = jax.block_until_ready(out)
    sf_out = jax.block_until_ready(sf_out)

    ref_out, ref_sf = _reference(x, weight, bias, s_pre)
    assert out.shape == (B, S, H) and sf_out.shape == (H,)
    assert jnp.allclose(out, ref_out, rtol=1e-5, atol=1e-5)
    assert jnp.allclose(sf_out, ref_sf, rtol=1e-6, atol=1e-7)

    # --- second check: lane-dense H (multiple of 128), multi-step grid with a
    # partial tail block (exercises the pl.cdiv tiling path), plus a tiling
    # consistency check (same rows -> same answer regardless of tm). ---
    k4, k5, k6 = jax.random.split(jax.random.fold_in(key, 1), 3)
    B2, S2, H2 = 2, 72, 128                                   # R = 144 rows
    x_big = jax.random.normal(k4, (B2, S2, H2), dtype=jnp.float32)
    w_big = 0.5 + jax.random.uniform(k5, (H2,), dtype=jnp.float32)
    b_big = 0.1 * jax.random.normal(k6, (H2,), dtype=jnp.float32)

    out_a, _ = int_layer_norm(x_big, w_big, b_big, s_pre, tm=64)  # grid 3, tail 16 rows
    out_b, _ = int_layer_norm(x_big, w_big, b_big, s_pre)         # auto tm (even split)
    out_a = jax.block_until_ready(out_a)
    out_b = jax.block_until_ready(out_b)
    assert jnp.allclose(out_a, out_b, rtol=1e-5, atol=1e-5)       # tiling-independent

    ref_big, _ = _reference(x_big, w_big, b_big, s_pre)
    # Loose tolerance: the quantized algorithm may shift by one integer step
    # (~1/std relative) under reduction-order differences; any tiling/masking/
    # indexing bug would be O(1) off and still be caught here.
    assert jnp.allclose(out_a, ref_big, rtol=5e-3, atol=5e-3)

    print("KERNEL_OK")
</pallas_src>

<mosaic_0001>
module attributes {stable_mosaic.version = 11 : i64} {
  func.func @intln_kernel(%arg0: i32, %arg1: memref<1x1xf32, #tpu.memory_space<smem>>, %arg2: memref<8x32xf32, #tpu.memory_space<vmem>>, %arg3: memref<2x32xf32, #tpu.memory_space<vmem>>, %arg4: memref<8x32xf32, #tpu.memory_space<vmem>>) attributes {dimension_semantics = [#tpu.dimension_semantics<parallel>], iteration_bounds = array<i64: 2>, scalar_prefetch = 0 : i64, scratch_operands = 0 : i64, tpu.core_type = #tpu.core_type<tc>, window_params = [{transform_indices = @transform_0, window_bounds = array<i64: 1, 1>}, {transform_indices = @transform_1, window_bounds = array<i64: 8, 32>}, {pipeline_mode = #tpu.pipeline_mode<synchronous>, transform_indices = @transform_2, window_bounds = array<i64: 2, 32>}, {transform_indices = @transform_3, window_bounds = array<i64: 8, 32>}]} {
    %c0 = arith.constant 0 : index
    %c0_0 = arith.constant 0 : index
    %0 = memref.load %arg1[%c0, %c0_0] : memref<1x1xf32, #tpu.memory_space<smem>>
    %c0_1 = arith.constant 0 : index
    %c0_2 = arith.constant 0 : index
    %1 = vector.load %arg2[%c0_1, %c0_2] : memref<8x32xf32, #tpu.memory_space<vmem>>, vector<8x32xf32>
    %2 = vector.broadcast %0 : f32 to vector<8x32xf32>
    %3 = arith.mulf %1, %2 : vector<8x32xf32>
    %cst = arith.constant dense<0.000000e+00> : vector<8xf32>
    %4 = vector.multi_reduction <add>, %3, %cst [1] : vector<8x32xf32> to vector<8xf32>
    %5 = vector.shape_cast %4 : vector<8xf32> to vector<8x1xf32>
    %cst_3 = arith.constant 3.200000e+01 : f32
    %6 = vector.broadcast %cst_3 : f32 to vector<8x1xf32>
    %7 = arith.divf %5, %6 : vector<8x1xf32>
    %8 = math.roundeven %7 : vector<8x1xf32>
    %9 = vector.broadcast %8 : vector<8x1xf32> to vector<8x32xf32>
    %10 = arith.subf %3, %9 : vector<8x32xf32>
    %11 = arith.mulf %10, %10 : vector<8x32xf32>
    %cst_4 = arith.constant dense<0.000000e+00> : vector<8xf32>
    %12 = vector.multi_reduction <add>, %11, %cst_4 [1] : vector<8x32xf32> to vector<8xf32>
    %13 = vector.shape_cast %12 : vector<8xf32> to vector<8x1xf32>
    %cst_5 = arith.constant 6.553600e+04 : f32
    %14 = vector.broadcast %cst_5 : f32 to vector<8x1xf32>
    %15 = arith.divf %13, %14 : vector<8x1xf32>
    %16 = math.floor %15 : vector<8x1xf32>
    %17 = arith.addf %14, %16 : vector<8x1xf32>
    %cst_6 = arith.constant 5.000000e-01 : f32
    %18 = vector.broadcast %cst_6 : f32 to vector<8x1xf32>
    %19 = arith.mulf %17, %18 : vector<8x1xf32>
    %20 = math.floor %19 : vector<8x1xf32>
    %21 = arith.divf %13, %20 : vector<8x1xf32>
    %22 = math.floor %21 : vector<8x1xf32>
    %23 = arith.addf %20, %22 : vector<8x1xf32>
    %cst_7 = arith.constant 5.000000e-01 : f32
    %24 = vector.broadcast %cst_7 : f32 to vector<8x1xf32>
    %25 = arith.mulf %23, %24 : vector<8x1xf32>
    %26 = math.floor %25 : vector<8x1xf32>
    %27 = arith.divf %13, %26 : vector<8x1xf32>
    %28 = math.floor %27 : vector<8x1xf32>
    %29 = arith.addf %26, %28 : vector<8x1xf32>
    %cst_8 = arith.constant 5.000000e-01 : f32
    %30 = vector.broadcast %cst_8 : f32 to vector<8x1xf32>
    %31 = arith.mulf %29, %30 : vector<8x1xf32>
    %32 = math.floor %31 : vector<8x1xf32>
    %33 = arith.divf %13, %32 : vector<8x1xf32>
    %34 = math.floor %33 : vector<8x1xf32>
    %35 = arith.addf %32, %34 : vector<8x1xf32>
    %cst_9 = arith.constant 5.000000e-01 : f32
    %36 = vector.broadcast %cst_9 : f32 to vector<8x1xf32>
    %37 = arith.mulf %35, %36 : vector<8x1xf32>
    %38 = math.floor %37 : vector<8x1xf32>
    %39 = arith.divf %13, %38 : vector<8x1xf32>
    %40 = math.floor %39 : vector<8x1xf32>
    %41 = arith.addf %38, %40 : vector<8x1xf32>
    %cst_10 = arith.constant 5.000000e-01 : f32
    %42 = vector.broadcast %cst_10 : f32 to vector<8x1xf32>
    %43 = arith.mulf %41, %42 : vector<8x1xf32>
    %44 = math.floor %43 : vector<8x1xf32>
    %45 = arith.divf %13, %44 : vector<8x1xf32>
    %46 = math.floor %45 : vector<8x1xf32>
    %47 = arith.addf %44, %46 : vector<8x1xf32>
    %cst_11 = arith.constant 5.000000e-01 : f32
    %48 = vector.broadcast %cst_11 : f32 to vector<8x1xf32>
    %49 = arith.mulf %47, %48 : vector<8x1xf32>
    %50 = math.floor %49 : vector<8x1xf32>
    %51 = arith.divf %13, %50 : vector<8x1xf32>
    %52 = math.floor %51 : vector<8x1xf32>
    %53 = arith.addf %50, %52 : vector<8x1xf32>
    %cst_12 = arith.constant 5.000000e-01 : f32
    %54 = vector.broadcast %cst_12 : f32 to vector<8x1xf32>
    %55 = arith.mulf %53, %54 : vector<8x1xf32>
    %56 = math.floor %55 : vector<8x1xf32>
    %57 = arith.divf %13, %56 : vector<8x1xf32>
    %58 = math.floor %57 : vector<8x1xf32>
    %59 = arith.addf %56, %58 : vector<8x1xf32>
    %cst_13 = arith.constant 5.000000e-01 : f32
    %60 = vector.broadcast %cst_13 : f32 to vector<8x1xf32>
    %61 = arith.mulf %59, %60 : vector<8x1xf32>
    %62 = math.floor %61 : vector<8x1xf32>
    %63 = arith.divf %13, %62 : vector<8x1xf32>
    %64 = math.floor %63 : vector<8x1xf32>
    %65 = arith.addf %62, %64 : vector<8x1xf32>
    %cst_14 = arith.constant 5.000000e-01 : f32
    %66 = vector.broadcast %cst_14 : f32 to vector<8x1xf32>
    %67 = arith.mulf %65, %66 : vector<8x1xf32>
    %68 = math.floor %67 : vector<8x1xf32>
    %69 = arith.divf %13, %68 : vector<8x1xf32>
    %70 = math.floor %69 : vector<8x1xf32>
    %71 = arith.addf %68, %70 : vector<8x1xf32>
    %cst_15 = arith.constant 5.000000e-01 : f32
    %72 = vector.broadcast %cst_15 : f32 to vector<8x1xf32>
    %73 = arith.mulf %71, %72 : vector<8x1xf32>
    %74 = math.floor %73 : vector<8x1xf32>
    %cst_16 = arith.constant 2.14748365E+9 : f32
    %75 = vector.broadcast %cst_16 : f32 to vector<8x1xf32>
    %76 = arith.divf %75, %74 : vector<8x1xf32>
    %77 = math.floor %76 : vector<8x1xf32>
    %cst_17 = arith.constant 5.000000e-01 : f32
    %78 = vector.broadcast %cst_17 : f32 to vector<8x1xf32>
    %79 = arith.mulf %77, %78 : vector<8x1xf32>
    %80 = vector.broadcast %79 : vector<8x1xf32> to vector<8x32xf32>
    %81 = arith.mulf %10, %80 : vector<8x32xf32>
    %82 = math.floor %81 : vector<8x32xf32>
    %c0_18 = arith.constant 0 : index
    %c0_19 = arith.constant 0 : index
    %83 = vector.load %arg3[%c0_18, %c0_19] : memref<2x32xf32, #tpu.memory_space<vmem>>, vector<1x32xf32>
    %84 = vector.broadcast %83 : vector<1x32xf32> to vector<8x32xf32>
    %85 = arith.addf %82, %84 : vector<8x32xf32>
    %c1 = arith.constant 1 : index
    %c0_20 = arith.constant 0 : index
    %86 = vector.load %arg3[%c1, %c0_20] : memref<2x32xf32, #tpu.memory_space<vmem>>, vector<1x32xf32>
    %87 = vector.broadcast %86 : vector<1x32xf32> to vector<8x32xf32>
    %88 = arith.mulf %85, %87 : vector<8x32xf32>
    %c0_21 = arith.constant 0 : index
    %c0_22 = arith.constant 0 : index
    %89 = vector.load %arg4[%c0_21, %c0_22] : memref<8x32xf32, #tpu.memory_space<vmem>>, vector<8x32xf32>
    tpu.vector_store %arg4[%c0_21, %c0_22], %88 {strides = array<i32>} : memref<8x32xf32, #tpu.memory_space<vmem>>, vector<8x32xf32>,
    return
  }
  func.func @transform_0(%arg0: i32) -> (i32, i32) {
    %c0_i32 = arith.constant 0 : i32
    %c0_i32_0 = arith.constant 0 : i32
    %c0_i32_1 = arith.constant 0 : i32
    return %c0_i32, %c0_i32_0 : i32, i32
  }
  func.func @transform_1(%arg0: i32) -> (i32, i32) {
    %c0_i32 = arith.constant 0 : i32
    %c0_i32_0 = arith.constant 0 : i32
    return %arg0, %c0_i32 : i32, i32
  }
  func.func @transform_2(%arg0: i32) -> (i32, i32) {
    %c0_i32 = arith.constant 0 : i32
    %c0_i32_0 = arith.constant 0 : i32
    %c0_i32_1 = arith.constant 0 : i32
    return %c0_i32, %c0_i32_0 : i32, i32
  }
  func.func @transform_3(%arg0: i32) -> (i32, i32) {
    %c0_i32 = arith.constant 0 : i32
    %c0_i32_0 = arith.constant 0 : i32
    return %arg0, %c0_i32 : i32, i32
  }
}

</mosaic_0001>

<llo_original>
// kernel: tpu_custom_call.1
$region0: #{tpu_custom_call.1}
  #allocation0 [shape = 'u32[]', space=smem, size = 0x4, offset = 0x4, fixed_abs, tag = 'smem constant byte address 0x4 - core index']
  #allocation1 [shape = 'u32[72,128]{1,0:T(1,128)}', space=vmem, size = 0x9000, scoped, tag = 'internal scratch']
  #allocation2 [shape = 'f32[1,1]{1,0:T(1,128)S(6)}', space=smem, size = 0x200, scoped, tag = 'scoped memory for tpu_custom_call.1']
  %s0 = inlined_call_operand.<no memory space> [shape: f32[1,1], index: 0, kind: input, shape index: {}]
  %s1 = inlined_call_operand.hbm [shape: f32[16,32], index: 1, kind: input, shape index: {}]
  %s2 = inlined_call_operand.vmem [shape: f32[2,32], index: 2, kind: input, shape index: {}]
  %s3 = inlined_call_operand.hbm [shape: f32[16,32], index: 3, kind: output, shape index: {}]
  %s4 = sld [smem:[#allocation0]]
  $region49: #{tpu_custom_call.1} parent=0
    _
  %s6 = ssub.s32 1, %s4
  %s7 = scalar_select 0, %s6, %s4
  %8 = sst [smem:[#allocation2]] %s0
  $region1: #{tpu_custom_call.1} parent=0
    #allocation3 [shape = 'u8[8192]{0}', space=vmem, size = 0x2000, scoped, tag = 'input window, operand 1']
    #allocation4 [shape = 's32[2]{0}', space=sflag, size = 0x8, scoped, tag = 'scoped memory for tpu_custom_call.1']
    #allocation5 [shape = 's32[2]{0}', space=sflag, size = 0x8, scoped, tag = 'scoped memory for tpu_custom_call.1']
    #allocation6 [shape = 'u8[8192]{0}', space=vmem, size = 0x2000, scoped, tag = 'output window, operand 0']
    %9 = vsyncpa [#allocation4], 0
    %s10 = scalar_lea.sflag [#allocation4], 1
    %11 = vsyncpa %s10, 0
    %12 = vsyncpa [#allocation5], 0
    %s13 = scalar_lea.sflag [#allocation5], 1
    %14 = vsyncpa %s13, 0
    loop: start=0, step=1, limit=4
    $region2: #{tpu_custom_call.1} parent=1 // loop_pre_header
      _
    $region3: #{tpu_custom_call.1} parent=1 // loop_header
      %s16 = sphi 0, %s20
      %p17 = scmp.ge.s32.totalorder %s16, 4
      %s24 = sphi 0, %s24
      %s26 = sphi 0, %s24
      %s27 = sphi 0, %s26
      %s41 = sphi 0, %s27
      %s47 = sphi 0, %s49
      %s50 = sphi 0, %s47
      %s51 = sphi 0, %s50
      %s67 = sphi 0, %s51
      %s71 = sphi 0, %s71
      %s73 = sphi 0, %s71
      %s74 = sphi 0, %s73
      %s88 = sphi 0, %s74
      %s94 = sphi 0, %s96
      %s97 = sphi 0, %s94
      %s98 = sphi 0, %s97
      %s114 = sphi 0, %s98
    $region4: #{tpu_custom_call.1} parent=1 // loop_header_branch
      %19 = sbr.rel (%p17) target = $region8
    $region5: #{tpu_custom_call.1} parent=1 // loop_body
      %s21 = ssub.s32 %s16, 1
      %s22 = ssub.s32 %s16, 2
      %s23 = sadd.s32 %s16, 1
      %s25 = sadd.s32 %s24, 1
      %p28 = scmp.eq.s32.totalorder %s16, 1
      %p29 = scmp.ne.s32.totalorder %s24, %s26
      %p30 = scmp.eq.s32.totalorder %s16, 0
      %p31 = por %p29, %p30
      %p32 = scmp.ne.s32.totalorder %s24, %s26
      %p33 = scmp.eq.s32.totalorder %s21, 1
      %p34 = por %p32, %p33
      %p35 = scmp.ne.s32.totalorder %s26, %s27
      %p36 = scmp.eq.s32.totalorder %s21, 0
      %p37 = por %p35, %p36
      %p38 = scmp.ne.s32.totalorder %s26, %s27
      %p39 = scmp.eq.s32.totalorder %s22, 1
      %p40 = por %p38, %p39
      %p42 = scmp.ne.s32.totalorder %s27, %s41
      %p43 = scmp.eq.s32.totalorder %s22, 0
      %p44 = por %p42, %p43
      %s45 = ssub.s32 %s16, %s23
      %p46 = scmp.eq.s32.totalorder %s45, 0
      %s48 = sadd.s32 %s47, 1
      %s49 = scalar_select %p46, %s47, %s48
      %p52 = pneg %p46
      %p53 = scmp.eq.s32.totalorder %s16, 1
      %p54 = por %p52, %p53
      %p55 = scmp.ne.s32.totalorder %s47, %s50
      %p56 = scmp.eq.s32.totalorder %s16, 0
      %p57 = por %p55, %p56
      %p58 = scmp.ne.s32.totalorder %s47, %s50
      %p59 = scmp.eq.s32.totalorder %s21, 1
      %p60 = por %p58, %p59
      %p61 = scmp.ne.s32.totalorder %s50, %s51
      %p62 = scmp.eq.s32.totalorder %s21, 0
      %p63 = por %p61, %p62
      %p64 = scmp.ne.s32.totalorder %s50, %s51
      %p65 = scmp.eq.s32.totalorder %s22, 1
      %p66 = por %p64, %p65
      %p68 = scmp.ne.s32.totalorder %s51, %s67
      %p69 = scmp.eq.s32.totalorder %s22, 0
      %p70 = por %p68, %p69
      %s72 = sadd.s32 %s71, 1
      %p75 = scmp.eq.s32.totalorder %s16, 1
      %p76 = scmp.ne.s32.totalorder %s71, %s73
      %p77 = scmp.eq.s32.totalorder %s16, 0
      %p78 = por %p76, %p77
      %p79 = scmp.ne.s32.totalorder %s71, %s73
      %p80 = scmp.eq.s32.totalorder %s21, 1
      %p81 = por %p79, %p80
      %p82 = scmp.ne.s32.totalorder %s73, %s74
      %p83 = scmp.eq.s32.totalorder %s21, 0
      %p84 = por %p82, %p83
      %p85 = scmp.ne.s32.totalorder %s73, %s74
      %p86 = scmp.eq.s32.totalorder %s22, 1
      %p87 = por %p85, %p86
      %p89 = scmp.ne.s32.totalorder %s74, %s88
      %p90 = scmp.eq.s32.totalorder %s22, 0
      %p91 = por %p89, %p90
      %s92 = ssub.s32 %s16, %s23
      %p93 = scmp.eq.s32.totalorder %s92, 0
      %s95 = sadd.s32 %s94, 1
      %s96 = scalar_select %p93, %s94, %s95
      %p99 = pneg %p93
      %p100 = scmp.eq.s32.totalorder %s16, 1
      %p101 = por %p99, %p100
      %p102 = scmp.ne.s32.totalorder %s94, %s97
      %p103 = scmp.eq.s32.totalorder %s16, 0
      %p104 = por %p102, %p103
      %p105 = scmp.ne.s32.totalorder %s94, %s97
      %p106 = scmp.eq.s32.totalorder %s21, 1
      %p107 = por %p105, %p106
      %p108 = scmp.ne.s32.totalorder %s97, %s98
      %p109 = scmp.eq.s32.totalorder %s21, 0
      %p110 = por %p108, %p109
      %p111 = scmp.ne.s32.totalorder %s97, %s98
      %p112 = scmp.eq.s32.totalorder %s22, 1
      %p113 = por %p111, %p112
      %p115 = scmp.ne.s32.totalorder %s98, %s114
      %p116 = scmp.eq.s32.totalorder %s22, 0
      %p117 = por %p115, %p116
      %p118 = scmp.le.s32.totalorder 1, %s16
      %p119 = scmp.lt.s32.totalorder %s16, 3
      %p120 = pnand %p118, %p119
      %p121 = pneg %p120
      // Predicated region
      $region9: #{tpu_custom_call.1} parent=5 // pred_check
        _
      $region10: #{tpu_custom_call.1} parent=5 // pred_check_branch
        %123 = sbr.rel (%p120) target = $region12
      $region11: #{tpu_custom_call.1} parent=5 // pred_region
        %s124 = ssub.s32 %s16, 1
        // Predicated region
        $region13: #{tpu_custom_call.1} parent=11 // pred_check
          %p125 = pneg %p37
        $region14: #{tpu_custom_call.1} parent=11 // pred_check_branch
          %127 = sbr.rel (%p125) target = $region16
        $region15: #{tpu_custom_call.1} parent=11 // pred_region
          _
        $region16: #{tpu_custom_call.1} parent=11 // pred_fallthru
          _
        // Predicated region
        $region17: #{tpu_custom_call.1} parent=11 // pred_check
          %p128 = pneg %p84
        $region18: #{tpu_custom_call.1} parent=11 // pred_check_branch
          %130 = sbr.rel (%p128) target = $region20
        $region19: #{tpu_custom_call.1} parent=11 // pred_region
          _
        $region20: #{tpu_custom_call.1} parent=11 // pred_fallthru
          _
      $region12: #{tpu_custom_call.1} parent=5 // pred_fallthru
        _
      %p131 = scmp.lt.s32.totalorder %s16, 2
      // Predicated region
      $region21: #{tpu_custom_call.1} parent=5 // pred_check
        %p132 = pneg %p131
      $region22: #{tpu_custom_call.1} parent=5 // pred_check_branch
        %134 = sbr.rel (%p132) target = $region24
      $region23: #{tpu_custom_call.1} parent=5 // pred_region
        // Predicated region
        $region25: #{tpu_custom_call.1} parent=23 // pred_check
          %p135 = pneg %p57
        $region26: #{tpu_custom_call.1} parent=23 // pred_check_branch
          %137 = sbr.rel (%p135) target = $region28
        $region27: #{tpu_custom_call.1} parent=23 // pred_region
          %s138 = sand.u32 %s47, 1
          %s139 = scalar_lea.sflag [#allocation4], %s138
          %s140 = sand.u32 %s47, 1
          %s141 = smul.addr %s140, 8
          %s142 = scalar_lea.vmem [#allocation3], %s141
          %144 = vsyncadd %s139, 0
          %s145 = smul.addr %s16, 8
          %s146 = scalar_lea.hbm %s1, %s145
          %s148 = sshll.u32 %s146, 4
          %s149 = int_to_ptr.hbm [resolvable:$true] %s148
          %s150 = sshll.u32 %s142, 4
          %s151 = int_to_ptr.vmem [resolvable:$true] %s150
          %153 = dma.hbm_to_vmem [thread:$0]  %s149, 128, %s151, %s139
        $region28: #{tpu_custom_call.1} parent=23 // pred_fallthru
          _
      $region24: #{tpu_custom_call.1} parent=5 // pred_fallthru
        _
      %p154 = scmp.le.s32.totalorder 1, %s16
      %p155 = scmp.lt.s32.totalorder %s16, 3
      %p156 = pnand %p154, %p155
      %p157 = pneg %p156
      // Predicated region
      $region29: #{tpu_custom_call.1} parent=5 // pred_check
        _
      $region30: #{tpu_custom_call.1} parent=5 // pred_check_branch
        %159 = sbr.rel (%p156) target = $region32
      $region31: #{tpu_custom_call.1} parent=5 // pred_region
        %s160 = ssub.s32 %s16, 1
        %s161 = sand.u32 %s50, 1
        %s162 = scalar_lea.sflag [#allocation4], %s161
        %s163 = sand.u32 %s50, 1
        %s164 = smul.addr %s163, 8
        %s165 = scalar_lea.vmem [#allocation3], %s164
        // Predicated region
        $region33: #{tpu_custom_call.1} parent=31 // pred_check
          %p166 = pneg %p63
        $region34: #{tpu_custom_call.1} parent=31 // pred_check_branch
          %168 = sbr.rel (%p166) target = $region36
        $region35: #{tpu_custom_call.1} parent=31 // pred_region
          %170 = dma.done %s162, 128
        $region36: #{tpu_custom_call.1} parent=31 // pred_fallthru
          _
        %p171 = pneg %p37
        %p172 = pneg %p34
        %s173 = sand.u32 %s50, 1
        %s174 = scalar_lea.sflag [#allocation4], %s173
        %s175 = sand.u32 %s50, 1
        %s176 = smul.addr %s175, 8
        %s177 = scalar_lea.vmem [#allocation3], %s176
        %p178 = pneg %p63
        %p179 = pneg %p60
        %p180 = pneg %p84
        %p181 = pneg %p81
        %p182 = pneg %p110
        %p183 = pneg %p107
        %s184 = sand.u32 %s97, 1
        %s185 = scalar_lea.sflag [#allocation5], %s184
        %s186 = sand.u32 %s97, 1
        %s187 = smul.addr %s186, 8
        %s188 = scalar_lea.vmem [#allocation6], %s187
        %s189 = sld [smem:[#allocation2]]
        %v190 = vld [vmem:[%s165] sm:$0xff]
        %v191 = vstv %s189
        %v192 = vmul.f32 %v190, %v191
        %vm193 = vcmask 261120
        %v194 = vsel %vm193, %v192, 0.0
        %195 = vadd.xlane.f32.xlu0 %v194
        %v196 = vpop.xlane.xlu0 %195
        %v197 = vrcp.pop 32.0
        %v198 = vmul.f32 32.0, %v197
        %v199 = vsub.f32 1.0, %v198
        %v200 = vmul.f32 %v197, %v199
        %v201 = vadd.f32 %v197, %v200
        %vm202 = vweird.f32 %v197
        %v203 = vsel %vm202, %v197, %v201
        %v204 = vmul.f32 %v196, %v203
        %v205 = vround.ne.pseudo %v204
        %v206 = vsub.f32 %v192, %v205
        %v207 = vmul.f32 %v206, %v206
        %v208 = vsel %vm193, %v207, 0.0
        %209 = vadd.xlane.f32.xlu0 %v208
        %v210 = vpop.xlane.xlu0 %209
        %v211 = vrcp.pop 65536.0
        %v212 = vmul.f32 65536.0, %v211
        %v213 = vsub.f32 1.0, %v212
        %v214 = vmul.f32 %v211, %v213
        %v215 = vadd.f32 %v211, %v214
        %vm216 = vweird.f32 %v211
        %v217 = vsel %vm216, %v211, %v215
        %v218 = vmul.f32 %v210, %v217
        %v219 = vfloor.f32 %v218
        %v220 = vadd.f32 %v219, 65536.0
        %v221 = vmul.f32 %v220, 0.5
        %v222 = vfloor.f32 %v221
        %v223 = vrcp.pop %v222
        %v224 = vmul.f32 %v222, %v223
        %v225 = vsub.f32 1.0, %v224
        %v226 = vmul.f32 %v223, %v225
        %v227 = vadd.f32 %v223, %v226
        %vm228 = vweird.f32 %v222
        %vm229 = vweird.f32 %v223
        %vm230 = vmor %vm228, %vm229
        %v231 = vsel %vm230, %v223, %v227
        %v232 = vand.u32 2147483647, %v222
        %vm233 = vcmp.eq.f32.partialorder %v232, 8.507059e+37
        %v234 = vand.u32 %v222, 2147483648
        %v235 = vor.u32 1.1754944e-38, %v234
        %v236 = vsel %vm233, %v235, %v231
        %v237 = vmul.f32 %v210, %v236
        %v238 = vfloor.f32 %v237
        %v239 = vadd.f32 %v222, %v238
        %v240 = vmul.f32 %v239, 0.5
        %v241 = vfloor.f32 %v240
        %v242 = vrcp.pop %v241
        %v243 = vmul.f32 %v241, %v242
        %v244 = vsub.f32 1.0, %v243
        %v245 = vmul.f32 %v242, %v244
        %v246 = vadd.f32 %v242, %v245
        %vm247 = vweird.f32 %v241
        %vm248 = vweird.f32 %v242
        %vm249 = vmor %vm247, %vm248
        %v250 = vsel %vm249, %v242, %v246
        %v251 = vand.u32 2147483647, %v241
        %vm252 = vcmp.eq.f32.partialorder %v251, 8.507059e+37
        %v253 = vand.u32 %v241, 2147483648
        %v254 = vor.u32 1.1754944e-38, %v253
        %v255 = vsel %vm252, %v254, %v250
        %v256 = vmul.f32 %v210, %v255
        %v257 = vfloor.f32 %v256
        %v258 = vadd.f32 %v241, %v257
        %v259 = vmul.f32 %v258, 0.5
        %v260 = vfloor.f32 %v259
        %v261 = vrcp.pop %v260
        %v262 = vmul.f32 %v260, %v261
        %v263 = vsub.f32 1.0, %v262
        %v264 = vmul.f32 %v261, %v263
        %v265 = vadd.f32 %v261, %v264
        %vm266 = vweird.f32 %v260
        %vm267 = vweird.f32 %v261
        %vm268 = vmor %vm266, %vm267
        %v269 = vsel %vm268, %v261, %v265
        %v270 = vand.u32 2147483647, %v260
        %vm271 = vcmp.eq.f32.partialorder %v270, 8.507059e+37
        %v272 = vand.u32 %v260, 2147483648
        %v273 = vor.u32 1.1754944e-38, %v272
        %v274 = vsel %vm271, %v273, %v269
        %v275 = vmul.f32 %v210, %v274
        %v276 = vfloor.f32 %v275
        %v277 = vadd.f32 %v260, %v276
        %v278 = vmul.f32 %v277, 0.5
        %v279 = vfloor.f32 %v278
        %v280 = vrcp.pop %v279
        %v281 = vmul.f32 %v279, %v280
        %v282 = vsub.f32 1.0, %v281
        %v283 = vmul.f32 %v280, %v282
        %v284 = vadd.f32 %v280, %v283
        %vm285 = vweird.f32 %v279
        %vm286 = vweird.f32 %v280
        %vm287 = vmor %vm285, %vm286
        %v288 = vsel %vm287, %v280, %v284
        %v289 = vand.u32 2147483647, %v279
        %vm290 = vcmp.eq.f32.partialorder %v289, 8.507059e+37
        %v291 = vand.u32 %v279, 2147483648
        %v292 = vor.u32 1.1754944e-38, %v291
        %v293 = vsel %vm290, %v292, %v288
        %v294 = vmul.f32 %v210, %v293
        %v295 = vfloor.f32 %v294
        %v296 = vadd.f32 %v279, %v295
        %v297 = vmul.f32 %v296, 0.5
        %v298 = vfloor.f32 %v297
        %v299 = vrcp.pop %v298
        %v300 = vmul.f32 %v298, %v299
        %v301 = vsub.f32 1.0, %v300
        %v302 = vmul.f32 %v299, %v301
        %v303 = vadd.f32 %v299, %v302
        %vm304 = vweird.f32 %v298
        %vm305 = vweird.f32 %v299
        %vm306 = vmor %vm304, %vm305
        %v307 = vsel %vm306, %v299, %v303
        %v308 = vand.u32 2147483647, %v298
        %vm309 = vcmp.eq.f32.partialorder %v308, 8.507059e+37
        %v310 = vand.u32 %v298, 2147483648
        %v311 = vor.u32 1.1754944e-38, %v310
        %v312 = vsel %vm309, %v311, %v307
        %v313 = vmul.f32 %v210, %v312
        %v314 = vfloor.f32 %v313
        %v315 = vadd.f32 %v298, %v314
        %v316 = vmul.f32 %v315, 0.5
        %v317 = vfloor.f32 %v316
        %v318 = vrcp.pop %v317
        %v319 = vmul.f32 %v317, %v318
        %v320 = vsub.f32 1.0, %v319
        %v321 = vmul.f32 %v318, %v320
        %v322 = vadd.f32 %v318, %v321
        %vm323 = vweird.f32 %v317
        %vm324 = vweird.f32 %v318
        %vm325 = vmor %vm323, %vm324
        %v326 = vsel %vm325, %v318, %v322
        %v327 = vand.u32 2147483647, %v317
        %vm328 = vcmp.eq.f32.partialorder %v327, 8.507059e+37
        %v329 = vand.u32 %v317, 2147483648
        %v330 = vor.u32 1.1754944e-38, %v329
        %v331 = vsel %vm328, %v330, %v326
        %v332 = vmul.f32 %v210, %v331
        %v333 = vfloor.f32 %v332
        %v334 = vadd.f32 %v317, %v333
        %v335 = vmul.f32 %v334, 0.5
        %v336 = vfloor.f32 %v335
        %v337 = vrcp.pop %v336
        %v338 = vmul.f32 %v336, %v337
        %v339 = vsub.f32 1.0, %v338
        %v340 = vmul.f32 %v337, %v339
        %v341 = vadd.f32 %v337, %v340
        %vm342 = vweird.f32 %v336
        %vm343 = vweird.f32 %v337
        %vm344 = vmor %vm342, %vm343
        %v345 = vsel %vm344, %v337, %v341
        %v346 = vand.u32 2147483647, %v336
        %vm347 = vcmp.eq.f32.partialorder %v346, 8.507059e+37
        %v348 = vand.u32 %v336, 2147483648
        %v349 = vor.u32 1.1754944e-38, %v348
        %v350 = vsel %vm347, %v349, %v345
        %v351 = vmul.f32 %v210, %v350
        %v352 = vfloor.f32 %v351
        %v353 = vadd.f32 %v336, %v352
        %v354 = vmul.f32 %v353, 0.5
        %v355 = vfloor.f32 %v354
        %v356 = vrcp.pop %v355
        %v357 = vmul.f32 %v355, %v356
        %v358 = vsub.f32 1.0, %v357
        %v359 = vmul.f32 %v356, %v358
        %v360 = vadd.f32 %v356, %v359
        %vm361 = vweird.f32 %v355
        %vm362 = vweird.f32 %v356
        %vm363 = vmor %vm361, %vm362
        %v364 = vsel %vm363, %v356, %v360
        %v365 = vand.u32 2147483647, %v355
        %vm366 = vcmp.eq.f32.partialorder %v365, 8.507059e+37
        %v367 = vand.u32 %v355, 2147483648
        %v368 = vor.u32 1.1754944e-38, %v367
        %v369 = vsel %vm366, %v368, %v364
        %v370 = vmul.f32 %v210, %v369
        %v371 = vfloor.f32 %v370
        %v372 = vadd.f32 %v355, %v371
        %v373 = vmul.f32 %v372, 0.5
        %v374 = vfloor.f32 %v373
        %v375 = vrcp.pop %v374
        %v376 = vmul.f32 %v374, %v375
        %v377 = vsub.f32 1.0, %v376
        %v378 = vmul.f32 %v375, %v377
        %v379 = vadd.f32 %v375, %v378
        %vm380 = vweird.f32 %v374
        %vm381 = vweird.f32 %v375
        %vm382 = vmor %vm380, %vm381
        %v383 = vsel %vm382, %v375, %v379
        %v384 = vand.u32 2147483647, %v374
        %vm385 = vcmp.eq.f32.partialorder %v384, 8.507059e+37
        %v386 = vand.u32 %v374, 2147483648
        %v387 = vor.u32 1.1754944e-38, %v386
        %v388 = vsel %vm385, %v387, %v383
        %v389 = vmul.f32 %v210, %v388
        %v390 = vfloor.f32 %v389
        %v391 = vadd.f32 %v374, %v390
        %v392 = vmul.f32 %v391, 0.5
        %v393 = vfloor.f32 %v392
        %v394 = vrcp.pop %v393
        %v395 = vmul.f32 %v393, %v394
        %v396 = vsub.f32 1.0, %v395
        %v397 = vmul.f32 %v394, %v396
        %v398 = vadd.f32 %v394, %v397
        %vm399 = vweird.f32 %v393
        %vm400 = vweird.f32 %v394
        %vm401 = vmor %vm399, %vm400
        %v402 = vsel %vm401, %v394, %v398
        %v403 = vand.u32 2147483647, %v393
        %vm404 = vcmp.eq.f32.partialorder %v403, 8.507059e+37
        %v405 = vand.u32 %v393, 2147483648
        %v406 = vor.u32 1.1754944e-38, %v405
        %v407 = vsel %vm404, %v406, %v402
        %v408 = vmul.f32 2.1474836e+09, %v407
        %v409 = vfloor.f32 %v408
        %v410 = vmul.f32 %v409, 0.5
        %v411 = vmul.f32 %v206, %v410
        %v412 = vfloor.f32 %v411
        %v413 = vld [vmem:[%s2] sm:$0x1]
        %v414 = vperm.slane %v413, 0
        %v415 = vadd.f32 %v412, %v414
        %v416 = vld [vmem:[%s2 + $0x1] sm:$0x1]
        %v417 = vperm.slane %v416, 0
        %v418 = vmul.f32 %v415, %v417
        %419 = vst.msk [vmem:[%s188] sm:$0xff] %vm193, %v418
        %s420 = sand.u32 %s97, 1
        %s421 = scalar_lea.sflag [#allocation5], %s420
        %s422 = sand.u32 %s97, 1
        %s423 = smul.addr %s422, 8
        %s424 = scalar_lea.vmem [#allocation6], %s423
        // Predicated region
        $region37: #{tpu_custom_call.1} parent=31 // pred_check
          %p425 = pneg %p107
        $region38: #{tpu_custom_call.1} parent=31 // pred_check_branch
          %427 = sbr.rel (%p425) target = $region40
        $region39: #{tpu_custom_call.1} parent=31 // pred_region
          %429 = vsyncadd %s421, 0
          %s430 = smul.addr %s21, 8
          %s431 = scalar_lea.hbm %s3, %s430
          %s433 = sshll.u32 %s424, 4
          %s434 = int_to_ptr.vmem [resolvable:$true] %s433
          %s435 = sshll.u32 %s431, 4
          %s436 = int_to_ptr.hbm [resolvable:$true] %s435
          %438 = dma.vmem_to_hbm [thread:$0]  %s434, 128, %s436, %s421
        $region40: #{tpu_custom_call.1} parent=31 // pred_fallthru
          _
      $region32: #{tpu_custom_call.1} parent=5 // pred_fallthru
        _
      %p439 = scmp.le.s32.totalorder 2, %s16
      // Predicated region
      $region41: #{tpu_custom_call.1} parent=5 // pred_check
        %p440 = pneg %p439
      $region42: #{tpu_custom_call.1} parent=5 // pred_check_branch
        %442 = sbr.rel (%p440) target = $region44
      $region43: #{tpu_custom_call.1} parent=5 // pred_region
        %s443 = ssub.s32 %s16, 2
        // Predicated region
        $region45: #{tpu_custom_call.1} parent=43 // pred_check
          %p444 = pneg %p113
        $region46: #{tpu_custom_call.1} parent=43 // pred_check_branch
          %446 = sbr.rel (%p444) target = $region48
        $region47: #{tpu_custom_call.1} parent=43 // pred_region
          %s447 = sand.u32 %s98, 1
          %s448 = scalar_lea.sflag [#allocation5], %s447
          %s449 = sand.u32 %s98, 1
          %s450 = smul.addr %s449, 8
          %s451 = scalar_lea.vmem [#allocation6], %s450
          %453 = dma.done %s448, 128
        $region48: #{tpu_custom_call.1} parent=43 // pred_fallthru
          _
      $region44: #{tpu_custom_call.1} parent=5 // pred_fallthru
        _
    $region6: #{tpu_custom_call.1} parent=1 // loop_footer
      %s20 = sadd.s32 1, %s16
    $region7: #{tpu_custom_call.1} parent=1 // loop_footer_branch
      %15 = sbr.rel target = $region3
    $region8: #{tpu_custom_call.1} parent=1 // loop_exit
      _
    %454 = vsyncpa [#allocation4], 1
    %s455 = scalar_lea.sflag [#allocation4], 1
    %456 = vsyncpa %s455, 1
    %457 = vsyncpa [#allocation5], 1
    %s458 = scalar_lea.sflag [#allocation5], 1
    %459 = vsyncpa %s458, 1

</llo_original>
